<compile_context>
chip_gen: v7x
topology: tpu7x:2x2x1
jax: 0.10.0
libtpu: 0.0.40
codegen_flags: <defaults>
</compile_context>

<pallas_src>
import functools

import jax
import jax.numpy as jnp
from jax.experimental import pallas as pl
from jax.experimental.pallas import tpu as pltpu


# ----------------------------------------------------------------------------
# Helpers
# ----------------------------------------------------------------------------
def _round_up(x, m):
    return -(-x // m) * m


def _pad2d(a, rows, cols):
    pr, pc = rows - a.shape[0], cols - a.shape[1]
    if pr or pc:
        a = jnp.pad(a, ((0, pr), (0, pc)))
    return a


def _pick_tile(n_pad, max_tile):
    """Largest multiple of 128 that is <= min(n_pad, max_tile) and divides n_pad."""
    cap = min(n_pad, max_tile)
    for t in range(cap, 0, -128):
        if n_pad % t == 0:
            return t
    return 128


def _vmem_budget():
    """Generation-aware per-core scoped-VMEM budget (bytes)."""
    cap = 0
    try:
        info = pltpu.get_tpu_info()
        cap = int(getattr(info, "vmem_capacity_bytes", 0) or 0)
    except Exception:
        cap = 0
    if cap <= 0:
        cap = 64 * 1024 * 1024  # conservative default: v7x per-TC VMEM
    # ~25% headroom for compiler-internal scratch:
    #   v7x (64 MiB/TC) -> ~48 MiB, v5e/v6e (128 MiB) -> ~96 MiB.
    return cap * 3 // 4


def build_normalized_adjacency(edge_index, num_nodes, n_pad=None,
                               dtype=jnp.float32):
    """Dense, padded D^{-1/2} (A + I) D^{-1/2} built in one fused pass.

    Matches PyG gcn_norm with added self-loops for simple graphs.  Note:
    duplicate edges are deduplicated and a pre-existing explicit self-loop
    would end up with weight 2 (deviation from PyG's scatter-add).
    """
    if n_pad is None:
        n_pad = num_nodes
    src, dst = edge_index[0], edge_index[1]
    a = jnp.zeros((n_pad, n_pad), dtype=jnp.float32)
    a = a.at[src, dst].set(1.0)
    diag = jnp.arange(num_nodes)
    a = a.at[diag, diag].add(1.0)                    # add self-loops
    deg = jnp.sum(a, axis=1)
    d_inv_sqrt = jnp.where(deg > 0, 1.0 / jnp.sqrt(deg), 0.0)
    # Normalization + dtype cast fused into the final product (no separate
    # f32 N*N materialize-then-cast pass; padded rows/cols stay zero).
    return (d_inv_sqrt[:, None] * a * d_inv_sqrt[None, :]).astype(dtype)


def glorot(key, shape, dtype=jnp.float32):
    fan_in, fan_out = shape
    limit = jnp.sqrt(6.0 / (fan_in + fan_out))
    return jax.random.uniform(key, shape, dtype, minval=-limit, maxval=limit)


# ----------------------------------------------------------------------------
# Kernel
# ----------------------------------------------------------------------------
def _gcn_agg_kernel(a_ref, h_ref, w_ref, b_ref, o_ref, acc_ref, *,
                    tk, apply_relu, h_resident):
    """acc_i = sum_k A[i,k] @ H[k]; epilogue: acc @ W + b (+ ReLU) -> out."""
    k = pl.program_id(1)

    @pl.when(k == 0)
    def _():
        acc_ref[...] = jnp.zeros_like(acc_ref)

    if h_resident:
        # Full H lives in VMEM (DMA'd once); slice out the k-th slab.
        start = pl.multiple_of(k * tk, tk)
        h_blk = h_ref[pl.ds(start, tk), :]
    else:
        h_blk = h_ref[...]

    acc_ref[...] += jnp.dot(a_ref[...], h_blk,
                            preferred_element_type=jnp.float32)

    @pl.when(k == pl.num_programs(1) - 1)
    def _():
        # Small 128x128 post-transform on the f32 accumulator + bias (+ ReLU).
        out = jnp.dot(acc_ref[...], w_ref[...],
                      preferred_element_type=jnp.float32)
        out = out + b_ref[...]
        if apply_relu:
            out = jnp.maximum(out, 0.0)              # f32 ReLU (v5e-safe)
        o_ref[...] = out.astype(o_ref.dtype)


# ----------------------------------------------------------------------------
# Layer wrapper
# ----------------------------------------------------------------------------
def _gcn_layer(a_pad, h_pad, w, b, *, apply_relu, tm, tk, vmem_budget,
               out_dtype):
    """One GCN layer on padded operands: out = A_hat @ H @ W + b (+ ReLU)."""
    n_pad, f_in_pad = h_pad.shape
    assert a_pad.shape == (n_pad, n_pad)
    f_out_pad = _round_up(w.shape[1], 128)

    w_pad = _pad2d(w.astype(jnp.float32), f_in_pad, f_out_pad)
    b_pad = _pad2d(b.reshape(1, -1).astype(jnp.float32), 1, f_out_pad)

    a_item = jnp.dtype(a_pad.dtype).itemsize
    h_item = jnp.dtype(h_pad.dtype).itemsize
    o_item = jnp.dtype(out_dtype).itemsize

    # Per-core VMEM footprint (pipeline buffers are budgeted double-buffered).
    fixed_bytes = (2 * tm * tk * a_item              # A_hat tiles
                   + 2 * tm * f_out_pad * o_item     # output tiles
                   + tm * f_in_pad * 4               # f32 accumulator scratch
                   + 2 * w_pad.size * 4              # weight (constant block)
                   + 2 * f_out_pad * 4)              # bias   (constant block)
    resident_bytes = 2 * n_pad * f_in_pad * h_item   # whole H, buffer pair
    streamed_bytes = 2 * tk * f_in_pad * h_item      # per-k H slab

    # Cap the resident block at half the per-core budget so both v7x cores
    # (row axis is "parallel") can hold their own copy inside 64 MiB/TC.
    h_resident = (resident_bytes <= vmem_budget // 2
                  and fixed_bytes + resident_bytes <= vmem_budget)

    if h_resident:
        h_spec = pl.BlockSpec((n_pad, f_in_pad), lambda i, k: (0, 0))
        needed = fixed_bytes + resident_bytes
    else:
        h_spec = pl.BlockSpec((tk, f_in_pad), lambda i, k: (k, 0))
        needed = fixed_bytes + streamed_bytes

    vmem_limit = min(max(needed * 5 // 4, 32 * 1024 * 1024), vmem_budget)

    kernel = functools.partial(_gcn_agg_kernel, tk=tk,
                               apply_relu=apply_relu, h_resident=h_resident)

    return pl.pallas_call(
        kernel,
        out_shape=jax.ShapeDtypeStruct((n_pad, f_out_pad), out_dtype),
        grid_spec=pltpu.PrefetchScalarGridSpec(
            num_scalar_prefetch=0,
            grid=(n_pad // tm, n_pad // tk),         # reduction axis last
            in_specs=[
                # NOTE: pipeline_mode=pl.Buffered(3) on this spec is a
                # candidate to sweep; with the enlarged tiles it is expected
                # to be neutral, so the default depth (2) is kept.
                pl.BlockSpec((tm, tk), lambda i, k: (i, k)),   # A_hat tile
                h_spec,                                        # H (resident/streamed)
                pl.BlockSpec((f_in_pad, f_out_pad), lambda i, k: (0, 0)),  # W
                pl.BlockSpec((1, f_out_pad), lambda i, k: (0, 0)),         # bias
            ],
            out_specs=pl.BlockSpec((tm, f_out_pad), lambda i, k: (i, 0)),
            scratch_shapes=[pltpu.VMEM((tm, f_in_pad), jnp.float32)],
        ),
        compiler_params=pltpu.CompilerParams(
            dimension_semantics=("parallel", "arbitrary"),
            vmem_limit_bytes=int(vmem_limit),
        ),
    )(a_pad, h_pad, w_pad, b_pad)


# ----------------------------------------------------------------------------
# Model forward
# ----------------------------------------------------------------------------
def gcn_net_forward(x, edge_index, params, *, compute_dtype=jnp.bfloat16):
    """Forward pass of GCN_Net (eval mode): conv -> relu -> ... -> conv."""
    n, f_in = x.shape

    # Pad N only to a multiple of 128; tiles are chosen to divide n_pad so
    # no extra N^2 traffic is created by tiling.
    n_pad = _round_up(n, 128)
    tm = _pick_tile(n_pad, 1024)
    tk = _pick_tile(n_pad, 2048)
    vmem_budget = _vmem_budget()

    # Padded bf16 A_hat built in one fused pass.
    a_pad = build_normalized_adjacency(edge_index, n, n_pad,
                                       dtype=compute_dtype)

    f_in_pad = _round_up(f_in, 128)
    h = _pad2d(x, n_pad, f_in_pad).astype(compute_dtype)

    num_layers = len(params)
    for i, (w, b) in enumerate(params):
        last = (i + 1 == num_layers)
        # Intermediate layers emit bf16 directly (halves intermediate traffic
        # and feeds the next layer's MXU without a wrapper-side cast); the
        # final layer emits f32.  F.dropout is identity in eval mode.
        out_dtype = jnp.float32 if last else compute_dtype
        h = _gcn_layer(a_pad, h, w, b, apply_relu=not last, tm=tm, tk=tk,
                       vmem_budget=vmem_budget, out_dtype=out_dtype)

    f_out_last = params[-1][0].shape[1]
    return h[:n, :f_out_last]


# ----------------------------------------------------------------------------
# Demo / self-check
# ----------------------------------------------------------------------------
if __name__ == "__main__":
    # Small deterministic problem: 16 nodes, in=8, hidden=32, out=4, max_depth=2.
    num_nodes, in_channels, hidden, out_channels = 16, 8, 32, 4

    key = jax.random.PRNGKey(0)
    k_x, k_w1, k_w2 = jax.random.split(key, 3)

    # Node features [N, F_in]
    x = jax.random.normal(k_x, (num_nodes, in_channels), dtype=jnp.float32)

    # Deterministic undirected ring + a few chords as edge_index [2, E]
    src = jnp.arange(num_nodes, dtype=jnp.int32)
    dst = (src + 1) % num_nodes
    chord_src = jnp.array([0, 3, 5, 8], dtype=jnp.int32)
    chord_dst = jnp.array([8, 11, 13, 0], dtype=jnp.int32)
    s_all = jnp.concatenate([src, dst, chord_src, chord_dst])
    d_all = jnp.concatenate([dst, src, chord_dst, chord_src])
    edge_index = jnp.stack([s_all, d_all], axis=0)

    # Parameters (GCNConv: weight [F_in, F_out] glorot, bias [F_out] zeros)
    w1 = glorot(k_w1, (in_channels, hidden))
    b1 = jnp.zeros((hidden,), dtype=jnp.float32)
    w2 = glorot(k_w2, (hidden, out_channels))
    b2 = jnp.zeros((out_channels,), dtype=jnp.float32)
    params = [(w1, b1), (w2, b2)]

    out = gcn_net_forward(x, edge_index, params)
    out = jax.block_until_ready(out)

    # Reference check in plain f32 JAX (kernel uses bf16 MXU operands, so use
    # a tolerance that accounts for bf16 rounding of A_hat / features).
    a_hat = build_normalized_adjacency(edge_index, num_nodes,
                                       dtype=jnp.float32)
    ref = jnp.maximum(a_hat @ (x @ w1) + b1[None, :], 0.0)
    ref = a_hat @ (ref @ w2) + b2[None, :]
    assert out.shape == (num_nodes, out_channels)
    assert jnp.allclose(out, ref, atol=5e-2, rtol=5e-2), (
        f"max abs err = {jnp.max(jnp.abs(out - ref))}")

    print("KERNEL_OK")
</pallas_src>

<mosaic_0001>
module attributes {stable_mosaic.version = 11 : i64} {
  func.func @_gcn_agg_kernel(%arg0: i32, %arg1: i32, %arg2: memref<128x128xbf16, #tpu.memory_space<vmem>>, %arg3: memref<128x128xbf16, #tpu.memory_space<vmem>>, %arg4: memref<128x128xf32, #tpu.memory_space<vmem>>, %arg5: memref<1x128xf32, #tpu.memory_space<vmem>>, %arg6: memref<128x128xbf16, #tpu.memory_space<vmem>>, %arg7: memref<128x128xf32, #tpu.memory_space<vmem>>) attributes {dimension_semantics = [#tpu.dimension_semantics<parallel>, #tpu.dimension_semantics<arbitrary>], iteration_bounds = array<i64: 1, 1>, scalar_prefetch = 0 : i64, scratch_operands = 1 : i64, tpu.core_type = #tpu.core_type<tc>, window_params = [{transform_indices = @transform_0, window_bounds = array<i64: 128, 128>}, {pipeline_mode = #tpu.pipeline_mode<synchronous>, transform_indices = @transform_1, window_bounds = array<i64: 128, 128>}, {pipeline_mode = #tpu.pipeline_mode<synchronous>, transform_indices = @transform_2, window_bounds = array<i64: 128, 128>}, {pipeline_mode = #tpu.pipeline_mode<synchronous>, transform_indices = @transform_3, window_bounds = array<i64: 1, 128>}, {transform_indices = @transform_4, window_bounds = array<i64: 128, 128>}]} {
    %c0_i32 = arith.constant 0 : i32
    %0 = arith.cmpi eq, %arg1, %c0_i32 : i32
    %1 = arith.extui %0 : i1 to i32
    %c0_i32_0 = arith.constant 0 : i32
    %2 = arith.cmpi ne, %1, %c0_i32_0 : i32
    scf.if %2 {
      %cst_9 = arith.constant 0.000000e+00 : f32
      %15 = vector.broadcast %cst_9 : f32 to vector<128x128xf32>
      %c0_10 = arith.constant 0 : index
      %c0_11 = arith.constant 0 : index
      %16 = vector.load %arg7[%c0_10, %c0_11] : memref<128x128xf32, #tpu.memory_space<vmem>>, vector<128x128xf32>
      tpu.vector_store %arg7[%c0_10, %c0_11], %15 {strides = array<i32>} : memref<128x128xf32, #tpu.memory_space<vmem>>, vector<128x128xf32>,
    } else {
    }
    %c128_i32 = arith.constant 128 : i32
    %3 = arith.muli %arg1, %c128_i32 : i32
    %4 = tpu.assume_multiple %3, 128 : i32
    %5 = arith.index_cast %4 : i32 to index
    %c0 = arith.constant 0 : index
    %6 = vector.load %arg3[%5, %c0] : memref<128x128xbf16, #tpu.memory_space<vmem>>, vector<128x128xbf16>
    %c0_1 = arith.constant 0 : index
    %c0_2 = arith.constant 0 : index
    %7 = vector.load %arg7[%c0_1, %c0_2] : memref<128x128xf32, #tpu.memory_space<vmem>>, vector<128x128xf32>
    %c0_3 = arith.constant 0 : index
    %c0_4 = arith.constant 0 : index
    %8 = vector.load %arg2[%c0_3, %c0_4] : memref<128x128xbf16, #tpu.memory_space<vmem>>, vector<128x128xbf16>
    %cst = arith.constant dense<0.000000e+00> : vector<128x128xf32>
    %9 = tpu.matmul %8, %6, %cst {dimension_numbers = #tpu.dot_dimension_numbers<[1], [0], [0], [1], [0, 0, 1, 1], [], []>} : vector<128x128xbf16>, vector<128x128xbf16>, vector<128x128xf32> -> vector<128x128xf32>
    %10 = arith.addf %7, %9 : vector<128x128xf32>
    %c0_5 = arith.constant 0 : index
    %c0_6 = arith.constant 0 : index
    %11 = vector.load %arg7[%c0_5, %c0_6] : memref<128x128xf32, #tpu.memory_space<vmem>>, vector<128x128xf32>
    tpu.vector_store %arg7[%c0_5, %c0_6], %10 {strides = array<i32>} : memref<128x128xf32, #tpu.memory_space<vmem>>, vector<128x128xf32>,
    %c0_i32_7 = arith.constant 0 : i32
    %12 = arith.cmpi eq, %arg1, %c0_i32_7 : i32
    %13 = arith.extui %12 : i1 to i32
    %c0_i32_8 = arith.constant 0 : i32
    %14 = arith.cmpi ne, %13, %c0_i32_8 : i32
    scf.if %14 {
      %c0_9 = arith.constant 0 : index
      %c0_10 = arith.constant 0 : index
      %15 = vector.load %arg7[%c0_9, %c0_10] : memref<128x128xf32, #tpu.memory_space<vmem>>, vector<128x128xf32>
      %c0_11 = arith.constant 0 : index
      %c0_12 = arith.constant 0 : index
      %16 = vector.load %arg4[%c0_11, %c0_12] : memref<128x128xf32, #tpu.memory_space<vmem>>, vector<128x128xf32>
      %cst_13 = arith.constant dense<0.000000e+00> : vector<128x128xf32>
      %17 = tpu.matmul %15, %16, %cst_13 {dimension_numbers = #tpu.dot_dimension_numbers<[1], [0], [0], [1], [0, 0, 1, 1], [], []>} : vector<128x128xf32>, vector<128x128xf32>, vector<128x128xf32> -> vector<128x128xf32>
      %c0_14 = arith.constant 0 : index
      %c0_15 = arith.constant 0 : index
      %18 = vector.load %arg5[%c0_14, %c0_15] : memref<1x128xf32, #tpu.memory_space<vmem>>, vector<1x128xf32>
      %19 = vector.broadcast %18 : vector<1x128xf32> to vector<128x128xf32>
      %20 = arith.addf %17, %19 : vector<128x128xf32>
      %cst_16 = arith.constant 0.000000e+00 : f32
      %21 = vector.broadcast %cst_16 : f32 to vector<128x128xf32>
      %22 = arith.maximumf %20, %21 : vector<128x128xf32>
      %23 = arith.truncf %22 : vector<128x128xf32> to vector<128x128xbf16>
      %c0_17 = arith.constant 0 : index
      %c0_18 = arith.constant 0 : index
      %24 = vector.load %arg6[%c0_17, %c0_18] : memref<128x128xbf16, #tpu.memory_space<vmem>>, vector<128x128xbf16>
      tpu.vector_store %arg6[%c0_17, %c0_18], %23 {strides = array<i32>} : memref<128x128xbf16, #tpu.memory_space<vmem>>, vector<128x128xbf16>,
    } else {
    }
    return
  }
  func.func @transform_0(%arg0: i32, %arg1: i32) -> (i32, i32) {
    %c0_i32 = arith.constant 0 : i32
    return %arg0, %arg1 : i32, i32
  }
  func.func @transform_1(%arg0: i32, %arg1: i32) -> (i32, i32) {
    %c0_i32 = arith.constant 0 : i32
    %c0_i32_0 = arith.constant 0 : i32
    %c0_i32_1 = arith.constant 0 : i32
    return %c0_i32, %c0_i32_0 : i32, i32
  }
  func.func @transform_2(%arg0: i32, %arg1: i32) -> (i32, i32) {
    %c0_i32 = arith.constant 0 : i32
    %c0_i32_0 = arith.constant 0 : i32
    %c0_i32_1 = arith.constant 0 : i32
    return %c0_i32, %c0_i32_0 : i32, i32
  }
  func.func @transform_3(%arg0: i32, %arg1: i32) -> (i32, i32) {
    %c0_i32 = arith.constant 0 : i32
    %c0_i32_0 = arith.constant 0 : i32
    %c0_i32_1 = arith.constant 0 : i32
    return %c0_i32, %c0_i32_0 : i32, i32
  }
  func.func @transform_4(%arg0: i32, %arg1: i32) -> (i32, i32) {
    %c0_i32 = arith.constant 0 : i32
    %c0_i32_0 = arith.constant 0 : i32
    return %arg0, %c0_i32 : i32, i32
  }
}

</mosaic_0001>

<llo_original>
// kernel: tpu_custom_call.1
$region0: #{tpu_custom_call.1}
  #allocation0 [shape = 'u32[]', space=smem, size = 0x4, offset = 0x4, fixed_abs, tag = 'smem constant byte address 0x4 - core index']
  #allocation1 [shape = 'u32[144,128]{1,0:T(1,128)}', space=vmem, size = 0x12000, scoped, tag = 'internal scratch']
  #allocation2 [shape = 'f32[128,128]{1,0:T(8,128)}', space=vmem, size = 0x10000, scoped, tag = 'scratch operand']
  %s0 = inlined_call_operand.hbm [shape: bf16[128,128], index: 0, kind: input, shape index: {}]
  %s1 = inlined_call_operand.hbm [shape: bf16[128,128], index: 1, kind: input, shape index: {}]
  %s2 = inlined_call_operand.hbm [shape: f32[128,128], index: 2, kind: input, shape index: {}]
  %s3 = inlined_call_operand.vmem [shape: f32[1,128], index: 3, kind: input, shape index: {}]
  %s4 = inlined_call_operand.hbm [shape: bf16[128,128], index: 4, kind: output, shape index: {}]
  %s5 = sld [smem:[#allocation0]]
  $region46: #{tpu_custom_call.1} parent=0
    _
  %s7 = ssub.s32 1, %s5
  %s8 = scalar_select 0, %s7, %s5
  $region1: #{tpu_custom_call.1} parent=0
    #allocation3 [shape = 'u8[32768]{0}', space=vmem, size = 0x8000, scoped, tag = 'input window, operand 0, single buffered']
    #allocation4 [shape = 's32[1]{0}', space=sflag, size = 0x4, scoped, tag = 'scoped memory for tpu_custom_call.1']
    #allocation5 [shape = 's32[1]{0}', space=sflag, size = 0x4, scoped, tag = 'scoped memory for tpu_custom_call.1']
    #allocation6 [shape = 'u8[32768]{0}', space=vmem, size = 0x8000, scoped, tag = 'input window, operand 1, single buffered']
    #allocation7 [shape = 's32[1]{0}', space=sflag, size = 0x4, scoped, tag = 'scoped memory for tpu_custom_call.1']
    #allocation8 [shape = 'u8[65536]{0}', space=vmem, size = 0x10000, scoped, tag = 'input window, operand 2, single buffered']
    #allocation9 [shape = 'u8[32768]{0}', space=vmem, size = 0x8000, scoped, tag = 'output window, operand 0, single buffered']
    %9 = vsyncpa [#allocation4], 0
    %10 = vsyncpa [#allocation7], 0
    %11 = vsyncpa [#allocation5], 0
    // Predicated region
    $region2: #{tpu_custom_call.1} parent=1 // pred_check
      _
    $region3: #{tpu_custom_call.1} parent=1 // pred_check_branch
      %13 = sbr.rel (0) target = $region5
    $region4: #{tpu_custom_call.1} parent=1 // pred_region
      %s15 = ssub.s32 1024, 1024
      %16 = vsyncadd [#allocation4], %s15
      %s17 = sshll.u32 [#allocation3], 4
      %s18 = int_to_ptr.vmem [resolvable:$true] %s17
      %23 = dma.hbm_to_vmem [thread:$0]  %s0, 1024, %s18, [#allocation4], 64, 64, 4
    $region5: #{tpu_custom_call.1} parent=1 // pred_fallthru
      _
    // Predicated region
    $region6: #{tpu_custom_call.1} parent=1 // pred_check
      _
    $region7: #{tpu_custom_call.1} parent=1 // pred_check_branch
      %25 = sbr.rel (0) target = $region9
    $region8: #{tpu_custom_call.1} parent=1 // pred_region
      %s27 = ssub.s32 1024, 1024
      %28 = vsyncadd [#allocation7], %s27
      %s29 = sshll.u32 [#allocation6], 4
      %s30 = int_to_ptr.vmem [resolvable:$true] %s29
      %35 = dma.hbm_to_vmem [thread:$0]  %s1, 1024, %s30, [#allocation7], 64, 64, 4
    $region9: #{tpu_custom_call.1} parent=1 // pred_fallthru
      _
    // Predicated region
    $region10: #{tpu_custom_call.1} parent=1 // pred_check
      _
    $region11: #{tpu_custom_call.1} parent=1 // pred_check_branch
      %37 = sbr.rel (0) target = $region13
    $region12: #{tpu_custom_call.1} parent=1 // pred_region
      %s39 = ssub.s32 2048, 2048
      %40 = vsyncadd [#allocation7], %s39
      %s41 = sshll.u32 [#allocation8], 4
      %s42 = int_to_ptr.vmem [resolvable:$true] %s41
      %47 = dma.hbm_to_vmem [thread:$0]  %s2, 2048, %s42, [#allocation7], 128, 128, 8
    $region13: #{tpu_custom_call.1} parent=1 // pred_fallthru
      _
    // Predicated region
    $region14: #{tpu_custom_call.1} parent=1 // pred_check
      _
    $region15: #{tpu_custom_call.1} parent=1 // pred_check_branch
      %49 = sbr.rel (0) target = $region17
    $region16: #{tpu_custom_call.1} parent=1 // pred_region
      _
    $region17: #{tpu_custom_call.1} parent=1 // pred_fallthru
      _
    // Predicated region
    $region18: #{tpu_custom_call.1} parent=1 // pred_check
      _
    $region19: #{tpu_custom_call.1} parent=1 // pred_check_branch
      %51 = sbr.rel (0) target = $region21
    $region20: #{tpu_custom_call.1} parent=1 // pred_region
      %52 = dma.done [#allocation4], 1024
    $region21: #{tpu_custom_call.1} parent=1 // pred_fallthru
      _
    // Predicated region
    $region22: #{tpu_custom_call.1} parent=1 // pred_check
      _
    $region23: #{tpu_custom_call.1} parent=1 // pred_check_branch
      %54 = sbr.rel (0) target = $region25
    $region24: #{tpu_custom_call.1} parent=1 // pred_region
      %55 = dma.done [#allocation7], 1024
    $region25: #{tpu_custom_call.1} parent=1 // pred_fallthru
      _
    // Predicated region
    $region26: #{tpu_custom_call.1} parent=1 // pred_check
      _
    $region27: #{tpu_custom_call.1} parent=1 // pred_check_branch
      %57 = sbr.rel (0) target = $region29
    $region28: #{tpu_custom_call.1} parent=1 // pred_region
      %58 = dma.done [#allocation7], 2048
    $region29: #{tpu_custom_call.1} parent=1 // pred_fallthru
      _
    %p60 = scmp.eq.s32.totalorder 0, 0
    // Predicated region
    $region30: #{tpu_custom_call.1} parent=1 // pred_check
      %p61 = pneg %p60
    $region31: #{tpu_custom_call.1} parent=1 // pred_check_branch
      %63 = sbr.rel (%p61) target = $region33
    $region32: #{tpu_custom_call.1} parent=1 // pred_region
      %64 = vst [vmem:[#allocation2] sm:$0xff] 0.0
      %65 = vst [vmem:[#allocation2 + $0x8] sm:$0xff] 0.0
      %66 = vst [vmem:[#allocation2 + $0x10] sm:$0xff] 0.0
      %67 = vst [vmem:[#allocation2 + $0x18] sm:$0xff] 0.0
      %68 = vst [vmem:[#allocation2 + $0x20] sm:$0xff] 0.0
      %69 = vst [vmem:[#allocation2 + $0x28] sm:$0xff] 0.0
      %70 = vst [vmem:[#allocation2 + $0x30] sm:$0xff] 0.0
      %71 = vst [vmem:[#allocation2 + $0x38] sm:$0xff] 0.0
      %72 = vst [vmem:[#allocation2 + $0x40] sm:$0xff] 0.0
      %73 = vst [vmem:[#allocation2 + $0x48] sm:$0xff] 0.0
      %74 = vst [vmem:[#allocation2 + $0x50] sm:$0xff] 0.0
      %75 = vst [vmem:[#allocation2 + $0x58] sm:$0xff] 0.0
      %76 = vst [vmem:[#allocation2 + $0x60] sm:$0xff] 0.0
      %77 = vst [vmem:[#allocation2 + $0x68] sm:$0xff] 0.0
      %78 = vst [vmem:[#allocation2 + $0x70] sm:$0xff] 0.0
      %79 = vst [vmem:[#allocation2 + $0x78] sm:$0xff] 0.0
    $region33: #{tpu_custom_call.1} parent=1 // pred_fallthru
      _
    %s80 = smul.u32 0, 128
    %s81 = sshra.s32 %s80, 3
    %s82 = sand.u32 %s80, 7
    %s83 = smul.addr %s81, 4
    %s84 = scalar_lea.vmem [#allocation6], %s83
    %v85 = vld [vmem:[%s84] sm:$0xf]
    %v86 = vld [vmem:[%s84 + $0x4] sm:$0xf]
    %v87 = vld [vmem:[%s84 + $0x8] sm:$0xf]
    %v88 = vld [vmem:[%s84 + $0xc] sm:$0xf]
    %v89 = vld [vmem:[%s84 + $0x10] sm:$0xf]
    %v90 = vld [vmem:[%s84 + $0x14] sm:$0xf]
    %v91 = vld [vmem:[%s84 + $0x18] sm:$0xf]
    %v92 = vld [vmem:[%s84 + $0x1c] sm:$0xf]
    %v93 = vld [vmem:[%s84 + $0x20] sm:$0xf]
    %v94 = vld [vmem:[%s84 + $0x24] sm:$0xf]
    %v95 = vld [vmem:[%s84 + $0x28] sm:$0xf]
    %v96 = vld [vmem:[%s84 + $0x2c] sm:$0xf]
    %v97 = vld [vmem:[%s84 + $0x30] sm:$0xf]
    %v98 = vld [vmem:[%s84 + $0x34] sm:$0xf]
    %v99 = vld [vmem:[%s84 + $0x38] sm:$0xf]
    %v100 = vld [vmem:[%s84 + $0x3c] sm:$0xf]
    %v101 = vld [vmem:[#allocation2] sm:$0xff]
    %v102 = vld [vmem:[#allocation2 + $0x8] sm:$0xff]
    %v103 = vld [vmem:[#allocation2 + $0x10] sm:$0xff]
    %v104 = vld [vmem:[#allocation2 + $0x18] sm:$0xff]
    %v105 = vld [vmem:[#allocation2 + $0x20] sm:$0xff]
    %v106 = vld [vmem:[#allocation2 + $0x28] sm:$0xff]
    %v107 = vld [vmem:[#allocation2 + $0x30] sm:$0xff]
    %v108 = vld [vmem:[#allocation2 + $0x38] sm:$0xff]
    %v109 = vld [vmem:[#allocation2 + $0x40] sm:$0xff]
    %v110 = vld [vmem:[#allocation2 + $0x48] sm:$0xff]
    %v111 = vld [vmem:[#allocation2 + $0x50] sm:$0xff]
    %v112 = vld [vmem:[#allocation2 + $0x58] sm:$0xff]
    %v113 = vld [vmem:[#allocation2 + $0x60] sm:$0xff]
    %v114 = vld [vmem:[#allocation2 + $0x68] sm:$0xff]
    %v115 = vld [vmem:[#allocation2 + $0x70] sm:$0xff]
    %v116 = vld [vmem:[#allocation2 + $0x78] sm:$0xff]
    %v117 = vld [vmem:[#allocation3] sm:$0xf]
    %v118 = vld [vmem:[#allocation3 + $0x4] sm:$0xf]
    %v119 = vld [vmem:[#allocation3 + $0x8] sm:$0xf]
    %v120 = vld [vmem:[#allocation3 + $0xc] sm:$0xf]
    %v121 = vld [vmem:[#allocation3 + $0x10] sm:$0xf]
    %v122 = vld [vmem:[#allocation3 + $0x14] sm:$0xf]
    %v123 = vld [vmem:[#allocation3 + $0x18] sm:$0xf]
    %v124 = vld [vmem:[#allocation3 + $0x1c] sm:$0xf]
    %v125 = vld [vmem:[#allocation3 + $0x20] sm:$0xf]
    %v126 = vld [vmem:[#allocation3 + $0x24] sm:$0xf]
    %v127 = vld [vmem:[#allocation3 + $0x28] sm:$0xf]
    %v128 = vld [vmem:[#allocation3 + $0x2c] sm:$0xf]
    %v129 = vld [vmem:[#allocation3 + $0x30] sm:$0xf]
    %v130 = vld [vmem:[#allocation3 + $0x34] sm:$0xf]
    %v131 = vld [vmem:[#allocation3 + $0x38] sm:$0xf]
    %v132 = vld [vmem:[#allocation3 + $0x3c] sm:$0xf]
    %v149 = vunpack.c.l.b16 %v117
    %v150 = vunpack.c.l.b16 %v118
    %v151 = vunpack.c.l.b16 %v119
    %v152 = vunpack.c.l.b16 %v120
    %v153 = vunpack.c.l.b16 %v121
    %v154 = vunpack.c.l.b16 %v122
    %v155 = vunpack.c.l.b16 %v123
    %v156 = vunpack.c.l.b16 %v124
    %v157 = vunpack.c.l.b16 %v125
    %v158 = vunpack.c.l.b16 %v126
    %v159 = vunpack.c.l.b16 %v127
    %v160 = vunpack.c.l.b16 %v128
    %v161 = vunpack.c.l.b16 %v129
    %v162 = vunpack.c.l.b16 %v130
    %v163 = vunpack.c.l.b16 %v131
    %v164 = vunpack.c.l.b16 %v132
    %v165 = vpack.c.b16 %v150, %v149
    %v166 = vpack.c.b16 %v152, %v151
    %v167 = vpack.c.b16 %v154, %v153
    %v168 = vpack.c.b16 %v156, %v155
    %v169 = vpack.c.b16 %v158, %v157
    %v170 = vpack.c.b16 %v160, %v159
    %v171 = vpack.c.b16 %v162, %v161
    %v172 = vpack.c.b16 %v164, %v163
    %v197 = vunpack.c.l.b16 %v85
    %v198 = vunpack.c.l.b16 %v86
    %v199 = vunpack.c.l.b16 %v87
    %v200 = vunpack.c.l.b16 %v88
    %v201 = vunpack.c.l.b16 %v89
    %v202 = vunpack.c.l.b16 %v90
    %v203 = vunpack.c.l.b16 %v91
    %v204 = vunpack.c.l.b16 %v92
    %v205 = vunpack.c.l.b16 %v93
    %v206 = vunpack.c.l.b16 %v94
    %v207 = vunpack.c.l.b16 %v95
    %v208 = vunpack.c.l.b16 %v96
    %v209 = vunpack.c.l.b16 %v97
    %v210 = vunpack.c.l.b16 %v98
    %v211 = vunpack.c.l.b16 %v99
    %v212 = vunpack.c.l.b16 %v100
    %v213 = vpack.c.b16 %v198, %v197
    %v214 = vpack.c.b16 %v200, %v199
    %v215 = vpack.c.b16 %v202, %v201
    %v216 = vpack.c.b16 %v204, %v203
    %v217 = vpack.c.b16 %v206, %v205
    %v218 = vpack.c.b16 %v208, %v207
    %v219 = vpack.c.b16 %v210, %v209
    %v220 = vpack.c.b16 %v212, %v211
    %229 = vmatprep.subr.bf16.mxu0 0
    %230 = vmatpush1.bf16.msra.mxu0 %v213
    %231 = vmatprep.subr.bf16.mxu0 0
    %232 = vmatpush1.bf16.msra.mxu0 %v214
    %233 = vmatprep.subr.bf16.mxu0 0
    %234 = vmatpush1.bf16.msra.mxu0 %v215
    %235 = vmatprep.subr.bf16.mxu0 0
    %236 = vmatpush1.bf16.msra.mxu0 %v216
    %237 = vmatprep.subr.bf16.mxu0 0
    %238 = vmatpush1.bf16.msra.mxu0 %v217
    %239 = vmatprep.subr.bf16.mxu0 0
    %240 = vmatpush1.bf16.msra.mxu0 %v218
    %241 = vmatprep.subr.bf16.mxu0 0
    %242 = vmatpush1.bf16.msra.mxu0 %v219
    %243 = vmatprep.subr.bf16.mxu0 0
    %244 = vmatpush1.bf16.msra.mxu0 %v220
    %245 = vmatprep.subr.bf16.mxu0 0
    %246 = vmatpush1.bf16.msra.mxu0 0
    %247 = vmatprep.subr.bf16.mxu0 0
    %248 = vmatpush1.bf16.msra.mxu0 0
    %249 = vmatprep.subr.bf16.mxu0 0
    %250 = vmatpush1.bf16.msra.mxu0 0
    %251 = vmatprep.subr.bf16.mxu0 0
    %252 = vmatpush1.bf16.msra.mxu0 0
    %253 = vmatprep.subr.bf16.mxu0 0
    %254 = vmatpush1.bf16.msra.mxu0 0
    %255 = vmatprep.subr.bf16.mxu0 0
    %256 = vmatpush1.bf16.msra.mxu0 0
    %257 = vmatprep.subr.bf16.mxu0 0
    %258 = vmatpush1.bf16.msra.mxu0 0
    %259 = vmatprep.subr.bf16.mxu0 0
    %260 = vmatpush1.bf16.msra.mxu0 0
    %261 = vmatprep.mubr.bf16.mxu0 0
    %262 = vmatmul.mubr.bf16.gmra.mrb[0].mxu0 %v165
    %v263 = vpop.f32.mrb[0].mxu0
    %v264 = vadd.f32 0.0, %v263
    %v265 = vpop.f32.mrb[0].mxu0
    %v266 = vpop.f32.mrb[0].mxu0
    %v267 = vadd.f32 0.0, %v266
    %v268 = vpop.f32.mrb[0].mxu0
    %269 = vmatprep.mubr.bf16.mxu0 0
    %270 = vmatmul.mubr.bf16.gmra.mrb[0].mxu0 %v166
    %v271 = vpop.f32.mrb[0].mxu0
    %v272 = vadd.f32 0.0, %v271
    %v273 = vpop.f32.mrb[0].mxu0
    %v274 = vpop.f32.mrb[0].mxu0
    %v275 = vadd.f32 0.0, %v274
    %v276 = vpop.f32.mrb[0].mxu0
    %277 = vmatprep.mubr.bf16.mxu0 0
    %278 = vmatmul.mubr.bf16.gmra.mrb[0].mxu0 %v167
    %v279 = vpop.f32.mrb[0].mxu0
    %v280 = vadd.f32 0.0, %v279
    %v281 = vpop.f32.mrb[0].mxu0
    %v282 = vpop.f32.mrb[0].mxu0
    %v283 = vadd.f32 0.0, %v282
    %v284 = vpop.f32.mrb[0].mxu0
    %285 = vmatprep.mubr.bf16.mxu0 0
    %286 = vmatmul.mubr.bf16.gmra.mrb[0].mxu0 %v168
    %v287 = vpop.f32.mrb[0].mxu0
    %v288 = vadd.f32 0.0, %v287
    %v289 = vpop.f32.mrb[0].mxu0
    %v290 = vpop.f32.mrb[0].mxu0
    %v291 = vadd.f32 0.0, %v290
    %v292 = vpop.f32.mrb[0].mxu0
    %293 = vmatprep.mubr.bf16.mxu0 0
    %294 = vmatmul.mubr.bf16.gmra.mrb[0].mxu0 %v169
    %v295 = vpop.f32.mrb[0].mxu0
    %v296 = vadd.f32 0.0, %v295
    %v297 = vpop.f32.mrb[0].mxu0
    %v298 = vpop.f32.mrb[0].mxu0
    %v299 = vadd.f32 0.0, %v298
    %v300 = vpop.f32.mrb[0].mxu0
    %301 = vmatprep.mubr.bf16.mxu0 0
    %302 = vmatmul.mubr.bf16.gmra.mrb[0].mxu0 %v170
    %v303 = vpop.f32.mrb[0].mxu0
    %v304 = vadd.f32 0.0, %v303
    %v305 = vpop.f32.mrb[0].mxu0
    %v306 = vpop.f32.mrb[0].mxu0
    %v307 = vadd.f32 0.0, %v306
    %v308 = vpop.f32.mrb[0].mxu0
    %309 = vmatprep.mubr.bf16.mxu0 0
    %310 = vmatmul.mubr.bf16.gmra.mrb[0].mxu0 %v171
    %v311 = vpop.f32.mrb[0].mxu0
    %v312 = vadd.f32 0.0, %v311
    %v313 = vpop.f32.mrb[0].mxu0
    %v314 = vpop.f32.mrb[0].mxu0
    %v315 = vadd.f32 0.0, %v314
    %v316 = vpop.f32.mrb[0].mxu0
    %317 = vmatprep.mubr.bf16.mxu0 0
    %318 = vmatmul.mubr.bf16.gmra.mrb[0].mxu0 %v172
    %v319 = vpop.f32.mrb[0].mxu0
    %v320 = vadd.f32 0.0, %v319
    %v321 = vpop.f32.mrb[0].mxu0
    %v322 = vpop.f32.mrb[0].mxu0
    %v323 = vadd.f32 0.0, %v322
    %v324 = vpop.f32.mrb[0].mxu0
    %325 = vdwg.mxu0
    %v326 = vadd.f32 %v101, %v264
    %v327 = vadd.f32 %v102, %v267
    %v328 = vadd.f32 %v103, %v272
    %v329 = vadd.f32 %v104, %v275
    %v330 = vadd.f32 %v105, %v280
    %v331 = vadd.f32 %v106, %v283
    %v332 = vadd.f32 %v107, %v288
    %v333 = vadd.f32 %v108, %v291
    %v334 = vadd.f32 %v109, %v296
    %v335 = vadd.f32 %v110, %v299
    %v336 = vadd.f32 %v111, %v304
    %v337 = vadd.f32 %v112, %v307
    %v338 = vadd.f32 %v113, %v312
    %v339 = vadd.f32 %v114, %v315
    %v340 = vadd.f32 %v115, %v320
    %v341 = vadd.f32 %v116, %v323
    %342 = vst [vmem:[#allocation2] sm:$0xff] %v326
    %343 = vst [vmem:[#allocation2 + $0x8] sm:$0xff] %v327
    %344 = vst [vmem:[#allocation2 + $0x10] sm:$0xff] %v328
    %345 = vst [vmem:[#allocation2 + $0x18] sm:$0xff] %v329
    %346 = vst [vmem:[#allocation2 + $0x20] sm:$0xff] %v330
    %347 = vst [vmem:[#allocation2 + $0x28] sm:$0xff] %v331
    %348 = vst [vmem:[#allocation2 + $0x30] sm:$0xff] %v332
    %349 = vst [vmem:[#allocation2 + $0x38] sm:$0xff] %v333
    %350 = vst [vmem:[#allocation2 + $0x40] sm:$0xff] %v334
    %351 = vst [vmem:[#allocation2 + $0x48] sm:$0xff] %v335
    %352 = vst [vmem:[#allocation2 + $0x50] sm:$0xff] %v336
    %353 = vst [vmem:[#allocation2 + $0x58] sm:$0xff] %v337
    %354 = vst [vmem:[#allocation2 + $0x60] sm:$0xff] %v338
    %355 = vst [vmem:[#allocation2 + $0x68] sm:$0xff] %v339
    %356 = vst [vmem:[#allocation2 + $0x70] sm:$0xff] %v340
    %357 = vst [vmem:[#allocation2 + $0x78] sm:$0xff] %v341
    // Predicated region
    $region34: #{tpu_custom_call.1} parent=1 // pred_check
      %p358 = pneg %p60
    $region35: #{tpu_custom_call.1} parent=1 // pred_check_branch
      %360 = sbr.rel (%p358) target = $region37
    $region36: #{tpu_custom_call.1} parent=1 // pred_region
      %v361 = vld [vmem:[#allocation2] sm:$0xff]
      %v362 = vld [vmem:[#allocation2 + $0x8] sm:$0xff]
      %v363 = vld [vmem:[#allocation2 + $0x10] sm:$0xff]
      %v364 = vld [vmem:[#allocation2 + $0x18] sm:$0xff]
      %v365 = vld [vmem:[#allocation2 + $0x20] sm:$0xff]
      %v366 = vld [vmem:[#allocation2 + $0x28] sm:$0xff]
      %v367 = vld [vmem:[#allocation2 + $0x30] sm:$0xff]
      %v368 = vld [vmem:[#allocation2 + $0x38] sm:$0xff]
      %v369 = vld [vmem:[#allocation2 + $0x40] sm:$0xff]
      %v370 = vld [vmem:[#allocation2 + $0x48] sm:$0xff]
      %v371 = vld [vmem:[#allocation2 + $0x50] sm:$0xff]
      %v372 = vld [vmem:[#allocation2 + $0x58] sm:$0xff]
      %v373 = vld [vmem:[#allocation2 + $0x60] sm:$0xff]
      %v374 = vld [vmem:[#allocation2 + $0x68] sm:$0xff]
      %v375 = vld [vmem:[#allocation2 + $0x70] sm:$0xff]
      %v376 = vld [vmem:[#allocation2 + $0x78] sm:$0xff]
      %v377 = vld [vmem:[#allocation8] sm:$0xff]
      %v378 = vld [vmem:[#allocation8 + $0x8] sm:$0xff]
      %v379 = vld [vmem:[#allocation8 + $0x10] sm:$0xff]
      %v380 = vld [vmem:[#allocation8 + $0x18] sm:$0xff]
      %v381 = vld [vmem:[#allocation8 + $0x20] sm:$0xff]
      %v382 = vld [vmem:[#allocation8 + $0x28] sm:$0xff]
      %v383 = vld [vmem:[#allocation8 + $0x30] sm:$0xff]
      %v384 = vld [vmem:[#allocation8 + $0x38] sm:$0xff]
      %v385 = vld [vmem:[#allocation8 + $0x40] sm:$0xff]
      %v386 = vld [vmem:[#allocation8 + $0x48] sm:$0xff]
      %v387 = vld [vmem:[#allocation8 + $0x50] sm:$0xff]
      %v388 = vld [vmem:[#allocation8 + $0x58] sm:$0xff]
      %v389 = vld [vmem:[#allocation8 + $0x60] sm:$0xff]
      %v390 = vld [vmem:[#allocation8 + $0x68] sm:$0xff]
      %v391 = vld [vmem:[#allocation8 + $0x70] sm:$0xff]
      %v392 = vld [vmem:[#allocation8 + $0x78] sm:$0xff]
      %v393 = vld [vmem:[%s3] sm:$0x1]
      %v395 = vlaneseq
      %v396 = vshrl.u32 %v395, 7
      %v397 = vsub.s32 0, %v396
      %v398 = vrot.slane %v393, %v397
      %400 = vmatprep.subr.mxu0 0.0
      %401 = vmatpush1.msra.mxu0 %v377
      %402 = vmatprep.subr.mxu0 0.0
      %403 = vmatpush1.msra.mxu0 %v378
      %404 = vmatprep.subr.mxu0 0.0
      %405 = vmatpush1.msra.mxu0 %v379
      %406 = vmatprep.subr.mxu0 0.0
      %407 = vmatpush1.msra.mxu0 %v380
      %408 = vmatprep.subr.mxu0 0.0
      %409 = vmatpush1.msra.mxu0 %v381
      %410 = vmatprep.subr.mxu0 0.0
      %411 = vmatpush1.msra.mxu0 %v382
      %412 = vmatprep.subr.mxu0 0.0
      %413 = vmatpush1.msra.mxu0 %v383
      %414 = vmatprep.subr.mxu0 0.0
      %415 = vmatpush1.msra.mxu0 %v384
      %416 = vmatprep.subr.mxu0 0.0
      %417 = vmatpush1.msra.mxu0 %v385
      %418 = vmatprep.subr.mxu0 0.0
      %419 = vmatpush1.msra.mxu0 %v386
      %420 = vmatprep.subr.mxu0 0.0
      %421 = vmatpush1.msra.mxu0 %v387
      %422 = vmatprep.subr.mxu0 0.0
      %423 = vmatpush1.msra.mxu0 %v388
      %424 = vmatprep.subr.mxu0 0.0
      %425 = vmatpush1.msra.mxu0 %v389
      %426 = vmatprep.subr.mxu0 0.0
      %427 = vmatpush1.msra.mxu0 %v390
      %428 = vmatprep.subr.mxu0 0.0
      %429 = vmatpush1.msra.mxu0 %v391
      %430 = vmatprep.subr.mxu0 0.0
      %431 = vmatpush1.msra.mxu0 %v392
      %432 = vmatprep.subr.mxu0 0.0
      %433 = vmatpush1.msra.mxu0 0.0
      %434 = vmatprep.subr.mxu0 0.0
      %435 = vmatpush1.msra.mxu0 0.0
      %436 = vmatprep.subr.mxu0 0.0
      %437 = vmatpush1.msra.mxu0 0.0
      %438 = vmatprep.subr.mxu0 0.0
      %439 = vmatpush1.msra.mxu0 0.0
      %440 = vmatprep.subr.mxu0 0.0
      %441 = vmatpush1.msra.mxu0 0.0
      %442 = vmatprep.subr.mxu0 0.0
      %443 = vmatpush1.msra.mxu0 0.0
      %444 = vmatprep.subr.mxu0 0.0
      %445 = vmatpush1.msra.mxu0 0.0
      %446 = vmatprep.subr.mxu0 0.0
      %447 = vmatpush1.msra.mxu0 0.0
      %448 = vmatprep.subr.mxu0 0.0
      %449 = vmatpush1.msra.mxu0 0.0
      %450 = vmatprep.subr.mxu0 0.0
      %451 = vmatpush1.msra.mxu0 0.0
      %452 = vmatprep.subr.mxu0 0.0
      %453 = vmatpush1.msra.mxu0 0.0
      %454 = vmatprep.subr.mxu0 0.0
      %455 = vmatpush1.msra.mxu0 0.0
      %456 = vmatprep.subr.mxu0 0.0
      %457 = vmatpush1.msra.mxu0 0.0
      %458 = vmatprep.subr.mxu0 0.0
      %459 = vmatpush1.msra.mxu0 0.0
      %460 = vmatprep.subr.mxu0 0.0
      %461 = vmatpush1.msra.mxu0 0.0
      %462 = vmatprep.subr.mxu0 0.0
      %463 = vmatpush1.msra.mxu0 0.0
      %464 = vmatprep.mubr.f32.mxu0 0.0
      %465 = vmatmul.mubr.f32.gmra.mrb[0].mxu0 %v361
      %v466 = vpop.f32.mrb[0].mxu0
      %v467 = vadd.f32 %v398, %v466
      %v468 = vpop.f32.mrb[0].mxu0
      %469 = vmatprep.mubr.f32.mxu0 0.0
      %470 = vmatmul.mubr.f32.gmra.mrb[0].mxu0 %v362
      %v471 = vpop.f32.mrb[0].mxu0
      %v472 = vadd.f32 %v398, %v471
      %v473 = vpop.f32.mrb[0].mxu0
      %474 = vmatprep.mubr.f32.mxu0 0.0
      %475 = vmatmul.mubr.f32.gmra.mrb[0].mxu0 %v363
      %v476 = vpop.f32.mrb[0].mxu0
      %v477 = vadd.f32 %v398, %v476
      %v478 = vpop.f32.mrb[0].mxu0
      %479 = vmatprep.mubr.f32.mxu0 0.0
      %480 = vmatmul.mubr.f32.gmra.mrb[0].mxu0 %v364
      %v481 = vpop.f32.mrb[0].mxu0
      %v482 = vadd.f32 %v398, %v481
      %v483 = vpop.f32.mrb[0].mxu0
      %484 = vmatprep.mubr.f32.mxu0 0.0
      %485 = vmatmul.mubr.f32.gmra.mrb[0].mxu0 %v365
      %v486 = vpop.f32.mrb[0].mxu0
      %v487 = vadd.f32 %v398, %v486
      %v488 = vpop.f32.mrb[0].mxu0
      %489 = vmatprep.mubr.f32.mxu0 0.0
      %490 = vmatmul.mubr.f32.gmra.mrb[0].mxu0 %v366
      %v491 = vpop.f32.mrb[0].mxu0
      %v492 = vadd.f32 %v398, %v491
      %v493 = vpop.f32.mrb[0].mxu0
      %494 = vmatprep.mubr.f32.mxu0 0.0
      %495 = vmatmul.mubr.f32.gmra.mrb[0].mxu0 %v367
      %v496 = vpop.f32.mrb[0].mxu0
      %v497 = vadd.f32 %v398, %v496
      %v498 = vpop.f32.mrb[0].mxu0
      %499 = vmatprep.mubr.f32.mxu0 0.0
      %500 = vmatmul.mubr.f32.gmra.mrb[0].mxu0 %v368
      %v501 = vpop.f32.mrb[0].mxu0
      %v502 = vadd.f32 %v398, %v501
      %v503 = vpop.f32.mrb[0].mxu0
      %504 = vmatprep.mubr.f32.mxu0 0.0
      %505 = vmatmul.mubr.f32.gmra.mrb[0].mxu0 %v369
      %v506 = vpop.f32.mrb[0].mxu0
      %v507 = vadd.f32 %v398, %v506
      %v508 = vpop.f32.mrb[0].mxu0
      %509 = vmatprep.mubr.f32.mxu0 0.0
      %510 = vmatmul.mubr.f32.gmra.mrb[0].mxu0 %v370
      %v511 = vpop.f32.mrb[0].mxu0
      %v512 = vadd.f32 %v398, %v511
      %v513 = vpop.f32.mrb[0].mxu0
      %514 = vmatprep.mubr.f32.mxu0 0.0
      %515 = vmatmul.mubr.f32.gmra.mrb[0].mxu0 %v371
      %v516 = vpop.f32.mrb[0].mxu0
      %v517 = vadd.f32 %v398, %v516
      %v518 = vpop.f32.mrb[0].mxu0
      %519 = vmatprep.mubr.f32.mxu0 0.0
      %520 = vmatmul.mubr.f32.gmra.mrb[0].mxu0 %v372
      %v521 = vpop.f32.mrb[0].mxu0
      %v522 = vadd.f32 %v398, %v521
      %v523 = vpop.f32.mrb[0].mxu0
      %524 = vmatprep.mubr.f32.mxu0 0.0
      %525 = vmatmul.mubr.f32.gmra.mrb[0].mxu0 %v373
      %v526 = vpop.f32.mrb[0].mxu0
      %v527 = vadd.f32 %v398, %v526
      %v528 = vpop.f32.mrb[0].mxu0
      %529 = vmatprep.mubr.f32.mxu0 0.0
      %530 = vmatmul.mubr.f32.gmra.mrb[0].mxu0 %v374
      %v531 = vpop.f32.mrb[0].mxu0
      %v532 = vadd.f32 %v398, %v531
      %v533 = vpop.f32.mrb[0].mxu0
      %534 = vmatprep.mubr.f32.mxu0 0.0
      %535 = vmatmul.mubr.f32.gmra.mrb[0].mxu0 %v375
      %v536 = vpop.f32.mrb[0].mxu0
      %v537 = vadd.f32 %v398, %v536
      %v538 = vpop.f32.mrb[0].mxu0
      %539 = vmatprep.mubr.f32.mxu0 0.0
      %540 = vmatmul.mubr.f32.gmra.mrb[0].mxu0 %v376
      %v541 = vpop.f32.mrb[0].mxu0
      %v542 = vadd.f32 %v398, %v541
      %v543 = vpop.f32.mrb[0].mxu0
      %544 = vdwg.mxu0
      %v545 = vmax.f32 %v467, 0.0
      %v546 = vmax.f32 %v472, 0.0
      %v547 = vmax.f32 %v477, 0.0
      %v548 = vmax.f32 %v482, 0.0
      %v549 = vmax.f32 %v487, 0.0
      %v550 = vmax.f32 %v492, 0.0
      %v551 = vmax.f32 %v497, 0.0
      %v552 = vmax.f32 %v502, 0.0
      %v553 = vmax.f32 %v507, 0.0
      %v554 = vmax.f32 %v512, 0.0
      %v555 = vmax.f32 %v517, 0.0
      %v556 = vmax.f32 %v522, 0.0
      %v557 = vmax.f32 %v527, 0.0
      %v558 = vmax.f32 %v532, 0.0
      %v559 = vmax.f32 %v537, 0.0
      %v560 = vmax.f32 %v542, 0.0
      %v561 = vpack.c.bf16 %v546, %v545
      %v562 = vpack.c.bf16 %v548, %v547
      %v563 = vpack.c.bf16 %v550, %v549
      %v564 = vpack.c.bf16 %v552, %v551
      %v565 = vpack.c.bf16 %v554, %v553
      %v566 = vpack.c.bf16 %v556, %v555
      %v567 = vpack.c.bf16 %v558, %v557
      %v568 = vpack.c.bf16 %v560, %v559
      %v577 = vunpack.c.l.b16 %v561
      %v578 = vunpack.c.h.b16 %v561
      %v579 = vunpack.c.l.b16 %v562
      %v580 = vunpack.c.h.b16 %v562
      %v581 = vunpack.c.l.b16 %v563
      %v582 = vunpack.c.h.b16 %v563
      %v583 = vunpack.c.l.b16 %v564
      %v584 = vunpack.c.h.b16 %v564
      %v585 = vunpack.c.l.b16 %v565
      %v586 = vunpack.c.h.b16 %v565
      %v587 = vunpack.c.l.b16 %v566
      %v588 = vunpack.c.h.b16 %v566
      %v589 = vunpack.c.l.b16 %v567
      %v590 = vunpack.c.h.b16 %v567
      %v591 = vunpack.c.l.b16 %v568
      %v592 = vunpack.c.h.b16 %v568
      %v593 = vpack.c.b16 %v577, %v577
      %v594 = vpack.c.b16 %v578, %v578
      %v595 = vpack.c.b16 %v579, %v579
      %v596 = vpack.c.b16 %v580, %v580
      %v597 = vpack.c.b16 %v581, %v581
      %v598 = vpack.c.b16 %v582, %v582
      %v599 = vpack.c.b16 %v583, %v583
      %v600 = vpack.c.b16 %v584, %v584
      %v601 = vpack.c.b16 %v585, %v585
      %v602 = vpack.c.b16 %v586, %v586
      %v603 = vpack.c.b16 %v587, %v587
      %v604 = vpack.c.b16 %v588, %v588
      %v605 = vpack.c.b16 %v589, %v589
      %v606 = vpack.c.b16 %v590, %v590
      %v607 = vpack.c.b16 %v591, %v591
      %v608 = vpack.c.b16 %v592, %v592
      %625 = vst [vmem:[#allocation9] sm:$0xf] %v593
      %626 = vst [vmem:[#allocation9 + $0x4] sm:$0xf] %v594
      %627 = vst [vmem:[#allocation9 + $0x8] sm:$0xf] %v595
      %628 = vst [vmem:[#allocation9 + $0xc] sm:$0xf] %v596
      %629 = vst [vmem:[#allocation9 + $0x10] sm:$0xf] %v597
      %630 = vst [vmem:[#allocation9 + $0x14] sm:$0xf] %v598
      %631 = vst [vmem:[#allocation9 + $0x18] sm:$0xf] %v599
      %632 = vst [vmem:[#allocation9 + $0x1c] sm:$0xf] %v600
      %633 = vst [vmem:[#allocation9 + $0x20] sm:$0xf] %v601
      %634 = vst [vmem:[#allocation9 + $0x24] sm:$0xf] %v602
      %635 = vst [vmem:[#allocation9 + $0x28] sm:$0xf] %v603
      %636 = vst [vmem:[#allocation9 + $0x2c] sm:$0xf] %v604
      %637 = vst [vmem:[#allocation9 + $0x30] sm:$0xf] %v605
      %638 = vst [vmem:[#allocation9 + $0x34] sm:$0xf] %v606
      %639 = vst [vmem:[#allocation9 + $0x38] sm:$0xf] %v607
      %640 = vst [vmem:[#allocation9 + $0x3c] sm:$0xf] %v608
    $region37: #{tpu_custom_call.1} parent=1 // pred_fallthru
      _
    // Predicated region
    $region38: #{tpu_custom_call.1} parent=1 // pred_check
      _
    $region39: #{tpu_custom_call.1} parent=1 // pred_check_branch
      %642 = sbr.rel (0) target = $region41
    $region40: #{tpu_custom_call.1} parent=1 // pred_region
      %s644 = ssub.s32 1024, 1024
      %645 = vsyncadd [#allocation5], %s644
      %s646 = sshll.u32 [#allocation9], 4
      %s647 = int_to_ptr.vmem [resolvable:$true] %s646
      %652 = dma.vmem_to_hbm [thread:$0]  %s647, 1024, %s4, [#allocation5], 64, 64, 4
    $region41: #{tpu_custom_call.1} parent=1 // pred_fallthru
      _
    // Predicated region
    $region42: #{tpu_custom_call.1} parent=1 // pred_check
      _
    $region43: #{tpu_custom_call.1} parent=1 // pred_check_branch
      %654 = sbr.rel (0) target = $region45
    $region44: #{tpu_custom_call.1} parent=1 // pred_region
      %655 = dma.done [#allocation5], 1024
    $region45: #{tpu_custom_call.1} parent=1 // pred_fallthru
      _
    %656 = vsyncpa [#allocation4], 1
    %657 = vsyncpa [#allocation7], 1
    %658 = vsyncpa [#allocation5], 1

</llo_original>
